<compile_context>
chip_gen: v7x
topology: tpu7x:2x2x1
jax: 0.10.0
libtpu: 0.0.40
codegen_flags: <defaults>
</compile_context>

<pallas_src>
import functools

import jax
import jax.numpy as jnp
from jax.experimental import pallas as pl
from jax.experimental.pallas import tpu as pltpu

EPS = 1e-5       # BatchNorm2d default eps
LANE = 128       # TPU lane width: channel dims are zero-padded to a multiple


def _round_up(v, m):
    return (v + m - 1) // m * m


# ------------------------------ Pallas kernels -------------------------------

def _accumulate_bn_stats(step, y_f32, acc_ref, stats_ref, n_valid):
    """Accumulate per-channel sum / sum-of-squares across a sequential
    ('arbitrary') grid axis; on the last step emit rows (mean, rstd)."""
    @pl.when(step == 0)
    def _():
        acc_ref[...] = jnp.zeros_like(acc_ref)

    s = jnp.sum(y_f32, axis=0, keepdims=True)
    sq = jnp.sum(y_f32 * y_f32, axis=0, keepdims=True)
    acc_ref[...] += jnp.concatenate([s, sq], axis=0)

    @pl.when(step == pl.num_programs(0) - 1)
    def _():
        inv_n = 1.0 / float(n_valid)
        mean = acc_ref[0:1, :] * inv_n
        var = acc_ref[1:2, :] * inv_n - mean * mean      # biased variance
        stats_ref[...] = jnp.concatenate([mean, jax.lax.rsqrt(var + EPS)], axis=0)


def conv1x1_stats_kernel(x_ref, w_ref, y_ref, stats_ref, acc_ref, *, n_valid):
    """conv1 (1x1) over one row tile + BN1 statistics accumulation."""
    i = pl.program_id(0)
    y = jnp.dot(x_ref[...].astype(w_ref.dtype), w_ref[...],
                preferred_element_type=jnp.float32)
    y_ref[...] = y.astype(y_ref.dtype)
    _accumulate_bn_stats(i, y, acc_ref, stats_ref, n_valid)


def bn_relu_conv3x3_stats_kernel(y1_ref, stats1_ref, w2_ref, y2_ref, stats2_ref,
                                 pad_ref, acc_ref, *, hh, ww, n_valid):
    """BN1 + ReLU on one image's (H, W, C) block, zero-pad into a VMEM scratch,
    3x3 conv (pad=1) as a single im2col matmul (K = 9*C), BN2 statistics."""
    n = pl.program_id(0)
    cp = y1_ref.shape[-1]
    mean, rstd = stats1_ref[0:1, :], stats1_ref[1:2, :]
    h = jnp.maximum((y1_ref[0].astype(jnp.float32) - mean) * rstd, 0.0)

    # spatial zero padding staged in VMEM -- the 9 taps never touch HBM
    pad_ref[...] = jnp.zeros(pad_ref.shape, pad_ref.dtype)
    pad_ref[1:1 + hh, 1:1 + ww, :] = h.astype(pad_ref.dtype)

    # im2col: 9 shifted views concatenated lane-wise -> one K = 9*C MXU dot
    taps = [pad_ref[dy:dy + hh, dx:dx + ww, :].reshape(hh * ww, cp)
            for dy in range(3) for dx in range(3)]
    y = jnp.dot(jnp.concatenate(taps, axis=1), w2_ref[...],
                preferred_element_type=jnp.float32)          # (H*W, C)
    y2_ref[...] = y.reshape(y2_ref.shape).astype(y2_ref.dtype)
    _accumulate_bn_stats(n, y, acc_ref, stats2_ref, n_valid)


def bn_relu_conv1x1_stats_kernel(y2_ref, stats2_ref, w3_ref, y3_ref, stats3_ref,
                                 acc_ref, *, n_valid):
    """BN2 + ReLU over one row tile, conv3 (1x1 expansion), BN3 statistics."""
    i = pl.program_id(0)
    tm = y2_ref.shape[0]
    mean, rstd = stats2_ref[0:1, :], stats2_ref[1:2, :]
    h = jnp.maximum((y2_ref[...].astype(jnp.float32) - mean) * rstd, 0.0)
    # rows beyond the real N*H*W (row-tile padding) must not pollute the stats
    row = i * tm + jax.lax.broadcasted_iota(jnp.int32, h.shape, 0)
    h = jnp.where(row < n_valid, h, 0.0)
    y = jnp.dot(h.astype(w3_ref.dtype), w3_ref[...],
                preferred_element_type=jnp.float32)
    y3_ref[...] = y.astype(y3_ref.dtype)
    _accumulate_bn_stats(i, y, acc_ref, stats3_ref, n_valid)


def bn_add_relu_kernel(y3_ref, stats3_ref, res_ref, o_ref):
    """BN3 + residual add + ReLU over one row tile."""
    mean, rstd = stats3_ref[0:1, :], stats3_ref[1:2, :]
    yn = (y3_ref[...].astype(jnp.float32) - mean) * rstd
    o_ref[...] = jnp.maximum(yn + res_ref[...].astype(jnp.float32), 0.0)


# --------------------------------- wrapper -----------------------------------

def bottleneck_forward(x_nchw, w1, w2, w3, *, compute_dtype=jnp.float32,
                       row_tile=256):
    """Bottleneck forward (stride=1, downsample=None, injection=None).

    x_nchw: (N, Cin, H, W) f32; w1: (P, Cin, 1, 1); w2: (P, P, 3, 3);
    w3: (4P, P, 1, 1) in PyTorch OIHW layout.  Requires Cin == 4 * P.

    compute_dtype=jnp.bfloat16 stores intermediate activations / weights and
    feeds the MXU in bf16 (recommended on v6e / v7x); all BatchNorm statistics
    and matmul accumulation stay in float32.
    """
    # TODO(synk): stride>1 / downsample / nonzero-injection paths of the
    # reference module are not implemented (not exercised by this config).
    f32 = jnp.float32
    cdt = compute_dtype
    N, Cin, H, W = x_nchw.shape
    P = w1.shape[0]
    C3 = 4 * P
    assert Cin == C3, "residual add requires inplanes == planes * expansion"
    NHW = N * H * W

    cin_p = _round_up(Cin, LANE)                 # lane-dense channel padding
    p_p = _round_up(P, LANE)
    c3_p = _round_up(C3, LANE)
    tm = min(row_tile, _round_up(NHW, 8))        # rows per tile (multiple of 8)
    rp = _round_up(NHW, tm)
    n_tiles = rp // tm

    # ---- layout glue: NCHW -> (rows, channels), zero-pad, weight reshapes ----
    x2d = jnp.transpose(x_nchw, (0, 2, 3, 1)).reshape(NHW, Cin).astype(f32)
    x2d = jnp.pad(x2d, ((0, rp - NHW), (0, cin_p - Cin)))
    w1m = jnp.pad(jnp.transpose(w1.reshape(P, Cin)),
                  ((0, cin_p - Cin), (0, p_p - P))).astype(cdt)       # (Cin_p, P_p)
    w2cat = jnp.concatenate(                                          # (9*P_p, P_p)
        [jnp.pad(jnp.transpose(w2[:, :, dy, dx]), ((0, p_p - P), (0, p_p - P)))
         for dy in range(3) for dx in range(3)], axis=0).astype(cdt)
    w3m = jnp.pad(jnp.transpose(w3.reshape(C3, P)),
                  ((0, p_p - P), (0, c3_p - C3))).astype(cdt)         # (P_p, C3_p)

    seq = pltpu.CompilerParams(dimension_semantics=("arbitrary",))
    par = pltpu.CompilerParams(dimension_semantics=("parallel",))

    def row_spec(c):
        return pl.BlockSpec((tm, c), lambda i: (i, 0))

    def full_spec(shape):
        nd = len(shape)
        return pl.BlockSpec(shape, lambda i: (0,) * nd)

    # ---- stage 1: conv1 (1x1) + BN1 stats  [row-tiled, sequential grid] ------
    y1, stats1 = pl.pallas_call(
        functools.partial(conv1x1_stats_kernel, n_valid=NHW),
        grid=(n_tiles,),
        in_specs=[row_spec(cin_p), full_spec((cin_p, p_p))],
        out_specs=[row_spec(p_p), full_spec((2, p_p))],
        out_shape=(jax.ShapeDtypeStruct((rp, p_p), cdt),
                   jax.ShapeDtypeStruct((2, p_p), f32)),
        scratch_shapes=[pltpu.VMEM((2, p_p), f32)],
        compiler_params=seq,
    )(x2d, w1m)

    # ---- stage 2: BN1+ReLU fused with conv2 (3x3) + BN2 stats  [per image] ---
    y1_4d = y1[:NHW].reshape(N, H, W, p_p)
    y2, stats2 = pl.pallas_call(
        functools.partial(bn_relu_conv3x3_stats_kernel, hh=H, ww=W, n_valid=NHW),
        grid=(N,),
        in_specs=[pl.BlockSpec((1, H, W, p_p), lambda n: (n, 0, 0, 0)),
                  full_spec((2, p_p)),
                  full_spec((9 * p_p, p_p))],
        out_specs=[pl.BlockSpec((1, H, W, p_p), lambda n: (n, 0, 0, 0)),
                   full_spec((2, p_p))],
        out_shape=(jax.ShapeDtypeStruct((N, H, W, p_p), cdt),
                   jax.ShapeDtypeStruct((2, p_p), f32)),
        scratch_shapes=[pltpu.VMEM((H + 2, W + 2, p_p), cdt),
                        pltpu.VMEM((2, p_p), f32)],
        compiler_params=seq,
    )(y1_4d, stats1, w2cat)

    # ---- stage 3: BN2+ReLU fused with conv3 (1x1) + BN3 stats  [row-tiled] ---
    y2_2d = jnp.pad(y2.reshape(NHW, p_p), ((0, rp - NHW), (0, 0)))
    y3, stats3 = pl.pallas_call(
        functools.partial(bn_relu_conv1x1_stats_kernel, n_valid=NHW),
        grid=(n_tiles,),
        in_specs=[row_spec(p_p), full_spec((2, p_p)), full_spec((p_p, c3_p))],
        out_specs=[row_spec(c3_p), full_spec((2, c3_p))],
        out_shape=(jax.ShapeDtypeStruct((rp, c3_p), cdt),
                   jax.ShapeDtypeStruct((2, c3_p), f32)),
        scratch_shapes=[pltpu.VMEM((2, c3_p), f32)],
        compiler_params=seq,
    )(y2_2d, stats2, w3m)

    # ---- stage 4: BN3 + residual + ReLU  [row-tiled, parallel grid] ----------
    out2d = pl.pallas_call(
        bn_add_relu_kernel,
        grid=(n_tiles,),
        in_specs=[row_spec(c3_p), full_spec((2, c3_p)), row_spec(c3_p)],
        out_specs=row_spec(c3_p),
        out_shape=jax.ShapeDtypeStruct((rp, c3_p), f32),
        compiler_params=par,
    )(y3, stats3, x2d)

    out = out2d[:NHW, :C3].reshape(N, H, W, C3)
    return jnp.transpose(out, (0, 3, 1, 2))


# ---------------------------- pure-JAX reference ------------------------------

def reference_forward(x, w1, w2, w3):
    def bn(y):
        mean = jnp.mean(y, axis=(0, 2, 3), keepdims=True)
        var = jnp.mean((y - mean) ** 2, axis=(0, 2, 3), keepdims=True)
        return (y - mean) * jax.lax.rsqrt(var + EPS)

    def conv(a, w, pad):
        return jax.lax.conv_general_dilated(
            a, w, (1, 1), pad, dimension_numbers=("NCHW", "OIHW", "NCHW"),
            precision=jax.lax.Precision.HIGHEST)

    out = jax.nn.relu(bn(conv(x, w1, "VALID")))
    out = jax.nn.relu(bn(conv(out, w2, ((1, 1), (1, 1)))))
    out = bn(conv(out, w3, "VALID"))
    return jax.nn.relu(out + x)


# ------------------------------------ main ------------------------------------

if __name__ == "__main__":
    key = jax.random.PRNGKey(0)
    N, H, W = 2, 16, 16
    planes = 4
    inplanes = planes * 4          # residual add valid without downsample

    k_x, k1, k2, k3 = jax.random.split(key, 4)
    x = jax.random.normal(k_x, (N, inplanes, H, W), jnp.float32)
    w1 = 0.1 * jax.random.normal(k1, (planes, inplanes, 1, 1), jnp.float32)
    w2 = 0.1 * jax.random.normal(k2, (planes, planes, 3, 3), jnp.float32)
    w3 = 0.1 * jax.random.normal(k3, (planes * 4, planes, 1, 1), jnp.float32)

    ref = jax.block_until_ready(reference_forward(x, w1, w2, w3))

    # float32 path (tight check against the reference)
    out = jax.block_until_ready(bottleneck_forward(x, w1, w2, w3))
    assert out.shape == (N, inplanes, H, W)
    assert jnp.allclose(out, ref, atol=2e-3, rtol=2e-3), \
        float(jnp.max(jnp.abs(out - ref)))

    # bf16 MXU path (v6e / v7x recommendation); stats / accumulation stay f32,
    # so only a small relative error vs the f32 reference is expected.
    out_bf16 = jax.block_until_ready(
        bottleneck_forward(x, w1, w2, w3, compute_dtype=jnp.bfloat16))
    rel_rms = float(jnp.sqrt(jnp.sum((out_bf16 - ref) ** 2) / jnp.sum(ref ** 2)))
    assert rel_rms < 3e-2, rel_rms

    print("KERNEL_OK")
</pallas_src>

<mosaic_0001>
module attributes {stable_mosaic.version = 11 : i64} {
  func.func @conv1x1_stats_kernel(%arg0: i32, %arg1: memref<256x128xf32, #tpu.memory_space<vmem>>, %arg2: memref<128x128xf32, #tpu.memory_space<vmem>>, %arg3: memref<256x128xf32, #tpu.memory_space<vmem>>, %arg4: memref<2x128xf32, #tpu.memory_space<vmem>>, %arg5: memref<2x128xf32, #tpu.memory_space<vmem>>) attributes {dimension_semantics = [#tpu.dimension_semantics<arbitrary>], iteration_bounds = array<i64: 2>, scalar_prefetch = 0 : i64, scratch_operands = 1 : i64, tpu.core_type = #tpu.core_type<tc>, window_params = [{transform_indices = @transform_0, window_bounds = array<i64: 256, 128>}, {pipeline_mode = #tpu.pipeline_mode<synchronous>, transform_indices = @transform_1, window_bounds = array<i64: 128, 128>}, {transform_indices = @transform_2, window_bounds = array<i64: 256, 128>}, {pipeline_mode = #tpu.pipeline_mode<synchronous>, transform_indices = @transform_3, window_bounds = array<i64: 2, 128>}]} {
    %c0 = arith.constant 0 : index
    %c0_0 = arith.constant 0 : index
    %0 = vector.load %arg1[%c0, %c0_0] : memref<256x128xf32, #tpu.memory_space<vmem>>, vector<256x128xf32>
    %c0_1 = arith.constant 0 : index
    %c0_2 = arith.constant 0 : index
    %1 = vector.load %arg2[%c0_1, %c0_2] : memref<128x128xf32, #tpu.memory_space<vmem>>, vector<128x128xf32>
    %cst = arith.constant dense<0.000000e+00> : vector<256x128xf32>
    %2 = tpu.matmul %0, %1, %cst {dimension_numbers = #tpu.dot_dimension_numbers<[1], [0], [0], [1], [0, 0, 1, 1], [], []>} : vector<256x128xf32>, vector<128x128xf32>, vector<256x128xf32> -> vector<256x128xf32>
    %c0_3 = arith.constant 0 : index
    %c0_4 = arith.constant 0 : index
    %3 = vector.load %arg3[%c0_3, %c0_4] : memref<256x128xf32, #tpu.memory_space<vmem>>, vector<256x128xf32>
    tpu.vector_store %arg3[%c0_3, %c0_4], %2 {strides = array<i32>} : memref<256x128xf32, #tpu.memory_space<vmem>>, vector<256x128xf32>,
    %c0_i32 = arith.constant 0 : i32
    %4 = arith.cmpi eq, %arg0, %c0_i32 : i32
    %5 = arith.extui %4 : i1 to i32
    %c0_i32_5 = arith.constant 0 : i32
    %6 = arith.cmpi ne, %5, %c0_i32_5 : i32
    scf.if %6 {
      %cst_13 = arith.constant 0.000000e+00 : f32
      %19 = vector.broadcast %cst_13 : f32 to vector<2x128xf32>
      %c0_14 = arith.constant 0 : index
      %c0_15 = arith.constant 0 : index
      %20 = vector.load %arg5[%c0_14, %c0_15] : memref<2x128xf32, #tpu.memory_space<vmem>>, vector<2x128xf32>
      tpu.vector_store %arg5[%c0_14, %c0_15], %19 {strides = array<i32>} : memref<2x128xf32, #tpu.memory_space<vmem>>, vector<2x128xf32>,
    } else {
    }
    %cst_6 = arith.constant dense<0.000000e+00> : vector<128xf32>
    %7 = vector.multi_reduction <add>, %2, %cst_6 [0] : vector<256x128xf32> to vector<128xf32>
    %8 = vector.shape_cast %7 : vector<128xf32> to vector<1x128xf32>
    %9 = arith.mulf %2, %2 : vector<256x128xf32>
    %cst_7 = arith.constant dense<0.000000e+00> : vector<128xf32>
    %10 = vector.multi_reduction <add>, %9, %cst_7 [0] : vector<256x128xf32> to vector<128xf32>
    %11 = vector.shape_cast %10 : vector<128xf32> to vector<1x128xf32>
    %c0_8 = arith.constant 0 : index
    %c0_9 = arith.constant 0 : index
    %12 = vector.load %arg5[%c0_8, %c0_9] : memref<2x128xf32, #tpu.memory_space<vmem>>, vector<2x128xf32>
    %13 = tpu.concatenate %8, %11 in 0 : vector<1x128xf32>, vector<1x128xf32> -> vector<2x128xf32>
    %14 = arith.addf %12, %13 : vector<2x128xf32>
    %c0_10 = arith.constant 0 : index
    %c0_11 = arith.constant 0 : index
    %15 = vector.load %arg5[%c0_10, %c0_11] : memref<2x128xf32, #tpu.memory_space<vmem>>, vector<2x128xf32>
    tpu.vector_store %arg5[%c0_10, %c0_11], %14 {strides = array<i32>} : memref<2x128xf32, #tpu.memory_space<vmem>>, vector<2x128xf32>,
    %c1_i32 = arith.constant 1 : i32
    %16 = arith.cmpi eq, %arg0, %c1_i32 : i32
    %17 = arith.extui %16 : i1 to i32
    %c0_i32_12 = arith.constant 0 : i32
    %18 = arith.cmpi ne, %17, %c0_i32_12 : i32
    scf.if %18 {
      %c0_13 = arith.constant 0 : index
      %c0_14 = arith.constant 0 : index
      %19 = vector.load %arg5[%c0_13, %c0_14] : memref<2x128xf32, #tpu.memory_space<vmem>>, vector<1x128xf32>
      %cst_15 = arith.constant 0.001953125 : f32
      %20 = vector.broadcast %cst_15 : f32 to vector<1x128xf32>
      %21 = arith.mulf %19, %20 : vector<1x128xf32>
      %c1 = arith.constant 1 : index
      %c0_16 = arith.constant 0 : index
      %22 = vector.load %arg5[%c1, %c0_16] : memref<2x128xf32, #tpu.memory_space<vmem>>, vector<1x128xf32>
      %cst_17 = arith.constant 0.001953125 : f32
      %23 = vector.broadcast %cst_17 : f32 to vector<1x128xf32>
      %24 = arith.mulf %22, %23 : vector<1x128xf32>
      %25 = arith.mulf %21, %21 : vector<1x128xf32>
      %26 = arith.subf %24, %25 : vector<1x128xf32>
      %cst_18 = arith.constant 9.99999974E-6 : f32
      %27 = vector.broadcast %cst_18 : f32 to vector<1x128xf32>
      %28 = arith.addf %26, %27 : vector<1x128xf32>
      %29 = math.rsqrt %28 : vector<1x128xf32>
      %30 = tpu.concatenate %21, %29 in 0 : vector<1x128xf32>, vector<1x128xf32> -> vector<2x128xf32>
      %c0_19 = arith.constant 0 : index
      %c0_20 = arith.constant 0 : index
      %31 = vector.load %arg4[%c0_19, %c0_20] : memref<2x128xf32, #tpu.memory_space<vmem>>, vector<2x128xf32>
      tpu.vector_store %arg4[%c0_19, %c0_20], %30 {strides = array<i32>} : memref<2x128xf32, #tpu.memory_space<vmem>>, vector<2x128xf32>,
    } else {
    }
    return
  }
  func.func @transform_0(%arg0: i32) -> (i32, i32) {
    %c0_i32 = arith.constant 0 : i32
    %c0_i32_0 = arith.constant 0 : i32
    return %arg0, %c0_i32 : i32, i32
  }
  func.func @transform_1(%arg0: i32) -> (i32, i32) {
    %c0_i32 = arith.constant 0 : i32
    %c0_i32_0 = arith.constant 0 : i32
    %c0_i32_1 = arith.constant 0 : i32
    return %c0_i32, %c0_i32_0 : i32, i32
  }
  func.func @transform_2(%arg0: i32) -> (i32, i32) {
    %c0_i32 = arith.constant 0 : i32
    %c0_i32_0 = arith.constant 0 : i32
    return %arg0, %c0_i32 : i32, i32
  }
  func.func @transform_3(%arg0: i32) -> (i32, i32) {
    %c0_i32 = arith.constant 0 : i32
    %c0_i32_0 = arith.constant 0 : i32
    %c0_i32_1 = arith.constant 0 : i32
    return %c0_i32, %c0_i32_0 : i32, i32
  }
}

</mosaic_0001>

<llo_original>
// kernel: tpu_custom_call.1
$region0: #{tpu_custom_call.1}
  #allocation0 [shape = 'u32[]', space=smem, size = 0x4, offset = 0x4, fixed_abs, tag = 'smem constant byte address 0x4 - core index']
  #allocation1 [shape = 'u32[144,128]{1,0:T(1,128)}', space=vmem, size = 0x12000, scoped, tag = 'internal scratch']
  #allocation2 [shape = 'f32[2,128]{1,0:T(2,128)}', space=vmem, size = 0x400, scoped, tag = 'scratch operand']
  %s0 = inlined_call_operand.hbm [shape: f32[512,128], index: 0, kind: input, shape index: {}]
  %s1 = inlined_call_operand.hbm [shape: f32[128,128], index: 1, kind: input, shape index: {}]
  %s2 = inlined_call_operand.hbm [shape: f32[512,128], index: 2, kind: output, shape index: {0}]
  %s3 = inlined_call_operand.hbm [shape: f32[2,128], index: 3, kind: output, shape index: {1}]
  %4 = xla_tuple %s2, %s3
  %s5 = sld [smem:[#allocation0]]
  $region65: #{tpu_custom_call.1} parent=0
    _
  %s7 = ssub.s32 1, %s5
  %s8 = scalar_select 0, %s7, %s5
  $region1: #{tpu_custom_call.1} parent=0
    #allocation3 [shape = 'u8[262144]{0}', space=vmem, size = 0x40000, scoped, tag = 'input window, operand 0']
    #allocation4 [shape = 's32[2]{0}', space=sflag, size = 0x8, scoped, tag = 'scoped memory for tpu_custom_call.1']
    #allocation5 [shape = 's32[2]{0}', space=sflag, size = 0x8, scoped, tag = 'scoped memory for tpu_custom_call.1']
    #allocation6 [shape = 'u8[65536]{0}', space=vmem, size = 0x10000, scoped, tag = 'input window, operand 1, single buffered']
    #allocation7 [shape = 's32[1]{0}', space=sflag, size = 0x4, scoped, tag = 'scoped memory for tpu_custom_call.1']
    #allocation8 [shape = 'u8[262144]{0}', space=vmem, size = 0x40000, scoped, tag = 'output window, operand 0']
    #allocation9 [shape = 'u8[1024]{0}', space=vmem, size = 0x400, scoped, tag = 'output window, operand 1, single buffered']
    #allocation10 [shape = 's32[1]{0}', space=sflag, size = 0x4, scoped, tag = 'scoped memory for tpu_custom_call.1']
    %9 = vsyncpa [#allocation4], 0
    %s10 = scalar_lea.sflag [#allocation4], 1
    %11 = vsyncpa %s10, 0
    %12 = vsyncpa [#allocation7], 0
    %13 = vsyncpa [#allocation5], 0
    %s14 = scalar_lea.sflag [#allocation5], 1
    %15 = vsyncpa %s14, 0
    %16 = vsyncpa [#allocation10], 0
    loop: start=0, step=1, limit=4
    $region2: #{tpu_custom_call.1} parent=1 // loop_pre_header
      _
    $region3: #{tpu_custom_call.1} parent=1 // loop_header
      %s18 = sphi 0, %s22
      %p19 = scmp.ge.s32.totalorder %s18, 4
      %s28 = sphi 0, %s30
      %s31 = sphi 0, %s28
      %s32 = sphi 0, %s31
      %s48 = sphi 0, %s32
      %s52 = sphi 0, %s52
      %s54 = sphi 0, %s52
      %s55 = sphi 0, %s54
      %s69 = sphi 0, %s55
      %s75 = sphi 0, %s77
      %s78 = sphi 0, %s75
      %s79 = sphi 0, %s78
      %s95 = sphi 0, %s79
      %s99 = sphi 0, %s99
      %s101 = sphi 0, %s99
      %s102 = sphi 0, %s101
      %s116 = sphi 0, %s102
    $region4: #{tpu_custom_call.1} parent=1 // loop_header_branch
      %21 = sbr.rel (%p19) target = $region8
    $region5: #{tpu_custom_call.1} parent=1 // loop_body
      %s23 = ssub.s32 %s18, 1
      %s24 = ssub.s32 %s18, 2
      %s25 = sadd.s32 %s18, 1
      %s26 = ssub.s32 %s18, %s25
      %p27 = scmp.eq.s32.totalorder %s26, 0
      %s29 = sadd.s32 %s28, 1
      %s30 = scalar_select %p27, %s28, %s29
      %p33 = pneg %p27
      %p34 = scmp.eq.s32.totalorder %s18, 1
      %p35 = por %p33, %p34
      %p36 = scmp.ne.s32.totalorder %s28, %s31
      %p37 = scmp.eq.s32.totalorder %s18, 0
      %p38 = por %p36, %p37
      %p39 = scmp.ne.s32.totalorder %s28, %s31
      %p40 = scmp.eq.s32.totalorder %s23, 1
      %p41 = por %p39, %p40
      %p42 = scmp.ne.s32.totalorder %s31, %s32
      %p43 = scmp.eq.s32.totalorder %s23, 0
      %p44 = por %p42, %p43
      %p45 = scmp.ne.s32.totalorder %s31, %s32
      %p46 = scmp.eq.s32.totalorder %s24, 1
      %p47 = por %p45, %p46
      %p49 = scmp.ne.s32.totalorder %s32, %s48
      %p50 = scmp.eq.s32.totalorder %s24, 0
      %p51 = por %p49, %p50
      %s53 = sadd.s32 %s52, 1
      %p56 = scmp.eq.s32.totalorder %s18, 1
      %p57 = scmp.ne.s32.totalorder %s52, %s54
      %p58 = scmp.eq.s32.totalorder %s18, 0
      %p59 = por %p57, %p58
      %p60 = scmp.ne.s32.totalorder %s52, %s54
      %p61 = scmp.eq.s32.totalorder %s23, 1
      %p62 = por %p60, %p61
      %p63 = scmp.ne.s32.totalorder %s54, %s55
      %p64 = scmp.eq.s32.totalorder %s23, 0
      %p65 = por %p63, %p64
      %p66 = scmp.ne.s32.totalorder %s54, %s55
      %p67 = scmp.eq.s32.totalorder %s24, 1
      %p68 = por %p66, %p67
      %p70 = scmp.ne.s32.totalorder %s55, %s69
      %p71 = scmp.eq.s32.totalorder %s24, 0
      %p72 = por %p70, %p71
      %s73 = ssub.s32 %s18, %s25
      %p74 = scmp.eq.s32.totalorder %s73, 0
      %s76 = sadd.s32 %s75, 1
      %s77 = scalar_select %p74, %s75, %s76
      %p80 = pneg %p74
      %p81 = scmp.eq.s32.totalorder %s18, 1
      %p82 = por %p80, %p81
      %p83 = scmp.ne.s32.totalorder %s75, %s78
      %p84 = scmp.eq.s32.totalorder %s18, 0
      %p85 = por %p83, %p84
      %p86 = scmp.ne.s32.totalorder %s75, %s78
      %p87 = scmp.eq.s32.totalorder %s23, 1
      %p88 = por %p86, %p87
      %p89 = scmp.ne.s32.totalorder %s78, %s79
      %p90 = scmp.eq.s32.totalorder %s23, 0
      %p91 = por %p89, %p90
      %p92 = scmp.ne.s32.totalorder %s78, %s79
      %p93 = scmp.eq.s32.totalorder %s24, 1
      %p94 = por %p92, %p93
      %p96 = scmp.ne.s32.totalorder %s79, %s95
      %p97 = scmp.eq.s32.totalorder %s24, 0
      %p98 = por %p96, %p97
      %s100 = sadd.s32 %s99, 1
      %p103 = scmp.eq.s32.totalorder %s18, 1
      %p104 = scmp.ne.s32.totalorder %s99, %s101
      %p105 = scmp.eq.s32.totalorder %s18, 0
      %p106 = por %p104, %p105
      %p107 = scmp.ne.s32.totalorder %s99, %s101
      %p108 = scmp.eq.s32.totalorder %s23, 1
      %p109 = por %p107, %p108
      %p110 = scmp.ne.s32.totalorder %s101, %s102
      %p111 = scmp.eq.s32.totalorder %s23, 0
      %p112 = por %p110, %p111
      %p113 = scmp.ne.s32.totalorder %s101, %s102
      %p114 = scmp.eq.s32.totalorder %s24, 1
      %p115 = por %p113, %p114
      %p117 = scmp.ne.s32.totalorder %s102, %s116
      %p118 = scmp.eq.s32.totalorder %s24, 0
      %p119 = por %p117, %p118
      %p120 = scmp.le.s32.totalorder 1, %s18
      %p121 = scmp.lt.s32.totalorder %s18, 3
      %p122 = pnand %p120, %p121
      %p123 = pneg %p122
      // Predicated region
      $region9: #{tpu_custom_call.1} parent=5 // pred_check
        _
      $region10: #{tpu_custom_call.1} parent=5 // pred_check_branch
        %125 = sbr.rel (%p122) target = $region12
      $region11: #{tpu_custom_call.1} parent=5 // pred_region
        %s126 = ssub.s32 %s18, 1
        // Predicated region
        $region13: #{tpu_custom_call.1} parent=11 // pred_check
          %p127 = pneg %p65
        $region14: #{tpu_custom_call.1} parent=11 // pred_check_branch
          %129 = sbr.rel (%p127) target = $region16
        $region15: #{tpu_custom_call.1} parent=11 // pred_region
          %s131 = ssub.s32 2048, 2048
          %132 = vsyncadd [#allocation7], %s131
          %s133 = sshll.u32 [#allocation6], 4
          %s134 = int_to_ptr.vmem [resolvable:$true] %s133
          %139 = dma.hbm_to_vmem [thread:$0]  %s1, 2048, %s134, [#allocation7], 128, 128, 8
        $region16: #{tpu_custom_call.1} parent=11 // pred_fallthru
          _
      $region12: #{tpu_custom_call.1} parent=5 // pred_fallthru
        _
      %p140 = scmp.lt.s32.totalorder %s18, 2
      // Predicated region
      $region17: #{tpu_custom_call.1} parent=5 // pred_check
        %p141 = pneg %p140
      $region18: #{tpu_custom_call.1} parent=5 // pred_check_branch
        %143 = sbr.rel (%p141) target = $region20
      $region19: #{tpu_custom_call.1} parent=5 // pred_region
        // Predicated region
        $region21: #{tpu_custom_call.1} parent=19 // pred_check
          %p144 = pneg %p38
        $region22: #{tpu_custom_call.1} parent=19 // pred_check_branch
          %146 = sbr.rel (%p144) target = $region24
        $region23: #{tpu_custom_call.1} parent=19 // pred_region
          %s147 = sand.u32 %s28, 1
          %s148 = scalar_lea.sflag [#allocation4], %s147
          %s149 = sand.u32 %s28, 1
          %s150 = smul.addr %s149, 256
          %s151 = scalar_lea.vmem [#allocation3], %s150
          %s152 = smul.u32 32, %s18
          %s154 = ssub.s32 4096, 4096
          %155 = vsyncadd %s148, %s154
          %s156 = smul.addr %s152, 128
          %s157 = scalar_lea.hbm %s0, %s156
          %s158 = sshll.u32 %s151, 4
          %s159 = int_to_ptr.vmem [resolvable:$true] %s158
          %164 = dma.hbm_to_vmem [thread:$0]  %s157, 4096, %s159, %s148, 128, 128, 8
        $region24: #{tpu_custom_call.1} parent=19 // pred_fallthru
          _
      $region20: #{tpu_custom_call.1} parent=5 // pred_fallthru
        _
      %p165 = scmp.le.s32.totalorder 1, %s18
      %p166 = scmp.lt.s32.totalorder %s18, 3
      %p167 = pnand %p165, %p166
      %p168 = pneg %p167
      // Predicated region
      $region25: #{tpu_custom_call.1} parent=5 // pred_check
        _
      $region26: #{tpu_custom_call.1} parent=5 // pred_check_branch
        %170 = sbr.rel (%p167) target = $region28
      $region27: #{tpu_custom_call.1} parent=5 // pred_region
        %s171 = ssub.s32 %s18, 1
        %s172 = sand.u32 %s31, 1
        %s173 = scalar_lea.sflag [#allocation4], %s172
        %s174 = sand.u32 %s31, 1
        %s175 = smul.addr %s174, 256
        %s176 = scalar_lea.vmem [#allocation3], %s175
        // Predicated region
        $region29: #{tpu_custom_call.1} parent=27 // pred_check
          %p177 = pneg %p44
        $region30: #{tpu_custom_call.1} parent=27 // pred_check_branch
          %179 = sbr.rel (%p177) target = $region32
        $region31: #{tpu_custom_call.1} parent=27 // pred_region
          %180 = dma.done %s173, 4096
        $region32: #{tpu_custom_call.1} parent=27 // pred_fallthru
          _
        // Predicated region
        $region33: #{tpu_custom_call.1} parent=27 // pred_check
          %p181 = pneg %p65
        $region34: #{tpu_custom_call.1} parent=27 // pred_check_branch
          %183 = sbr.rel (%p181) target = $region36
        $region35: #{tpu_custom_call.1} parent=27 // pred_region
          %184 = dma.done [#allocation7], 2048
        $region36: #{tpu_custom_call.1} parent=27 // pred_fallthru
          _
        %s185 = sand.u32 %s31, 1
        %s186 = scalar_lea.sflag [#allocation4], %s185
        %s187 = sand.u32 %s31, 1
        %s188 = smul.addr %s187, 256
        %s189 = scalar_lea.vmem [#allocation3], %s188
        %p190 = pneg %p44
        %p191 = pneg %p41
        %p192 = pneg %p65
        %p193 = pneg %p62
        %p194 = pneg %p91
        %p195 = pneg %p88
        %s196 = sand.u32 %s78, 1
        %s197 = scalar_lea.sflag [#allocation5], %s196
        %s198 = sand.u32 %s78, 1
        %s199 = smul.addr %s198, 256
        %s200 = scalar_lea.vmem [#allocation8], %s199
        %p201 = pneg %p112
        %p202 = pneg %p109
        %s203 = smul.u32 32, %s23
        %s204 = smul.u32 32, %s23
        %v205 = vld [vmem:[%s176] sm:$0xff]
        %v206 = vld [vmem:[%s176 + $0x8] sm:$0xff]
        %v207 = vld [vmem:[%s176 + $0x10] sm:$0xff]
        %v208 = vld [vmem:[%s176 + $0x18] sm:$0xff]
        %v209 = vld [vmem:[%s176 + $0x20] sm:$0xff]
        %v210 = vld [vmem:[%s176 + $0x28] sm:$0xff]
        %v211 = vld [vmem:[%s176 + $0x30] sm:$0xff]
        %v212 = vld [vmem:[%s176 + $0x38] sm:$0xff]
        %v213 = vld [vmem:[%s176 + $0x40] sm:$0xff]
        %v214 = vld [vmem:[%s176 + $0x48] sm:$0xff]
        %v215 = vld [vmem:[%s176 + $0x50] sm:$0xff]
        %v216 = vld [vmem:[%s176 + $0x58] sm:$0xff]
        %v217 = vld [vmem:[%s176 + $0x60] sm:$0xff]
        %v218 = vld [vmem:[%s176 + $0x68] sm:$0xff]
        %v219 = vld [vmem:[%s176 + $0x70] sm:$0xff]
        %v220 = vld [vmem:[%s176 + $0x78] sm:$0xff]
        %v221 = vld [vmem:[%s176 + $0x80] sm:$0xff]
        %v222 = vld [vmem:[%s176 + $0x88] sm:$0xff]
        %v223 = vld [vmem:[%s176 + $0x90] sm:$0xff]
        %v224 = vld [vmem:[%s176 + $0x98] sm:$0xff]
        %v225 = vld [vmem:[%s176 + $0xa0] sm:$0xff]
        %v226 = vld [vmem:[%s176 + $0xa8] sm:$0xff]
        %v227 = vld [vmem:[%s176 + $0xb0] sm:$0xff]
        %v228 = vld [vmem:[%s176 + $0xb8] sm:$0xff]
        %v229 = vld [vmem:[%s176 + $0xc0] sm:$0xff]
        %v230 = vld [vmem:[%s176 + $0xc8] sm:$0xff]
        %v231 = vld [vmem:[%s176 + $0xd0] sm:$0xff]
        %v232 = vld [vmem:[%s176 + $0xd8] sm:$0xff]
        %v233 = vld [vmem:[%s176 + $0xe0] sm:$0xff]
        %v234 = vld [vmem:[%s176 + $0xe8] sm:$0xff]
        %v235 = vld [vmem:[%s176 + $0xf0] sm:$0xff]
        %v236 = vld [vmem:[%s176 + $0xf8] sm:$0xff]
        %v237 = vld [vmem:[#allocation6] sm:$0xff]
        %v238 = vld [vmem:[#allocation6 + $0x8] sm:$0xff]
        %v239 = vld [vmem:[#allocation6 + $0x10] sm:$0xff]
        %v240 = vld [vmem:[#allocation6 + $0x18] sm:$0xff]
        %v241 = vld [vmem:[#allocation6 + $0x20] sm:$0xff]
        %v242 = vld [vmem:[#allocation6 + $0x28] sm:$0xff]
        %v243 = vld [vmem:[#allocation6 + $0x30] sm:$0xff]
        %v244 = vld [vmem:[#allocation6 + $0x38] sm:$0xff]
        %v245 = vld [vmem:[#allocation6 + $0x40] sm:$0xff]
        %v246 = vld [vmem:[#allocation6 + $0x48] sm:$0xff]
        %v247 = vld [vmem:[#allocation6 + $0x50] sm:$0xff]
        %v248 = vld [vmem:[#allocation6 + $0x58] sm:$0xff]
        %v249 = vld [vmem:[#allocation6 + $0x60] sm:$0xff]
        %v250 = vld [vmem:[#allocation6 + $0x68] sm:$0xff]
        %v251 = vld [vmem:[#allocation6 + $0x70] sm:$0xff]
        %v252 = vld [vmem:[#allocation6 + $0x78] sm:$0xff]
        %253 = vmatprep.subr.mxu0 0.0
        %254 = vmatpush1.msra.mxu0 %v237
        %255 = vmatprep.subr.mxu0 0.0
        %256 = vmatpush1.msra.mxu0 %v238
        %257 = vmatprep.subr.mxu0 0.0
        %258 = vmatpush1.msra.mxu0 %v239
        %259 = vmatprep.subr.mxu0 0.0
        %260 = vmatpush1.msra.mxu0 %v240
        %261 = vmatprep.subr.mxu0 0.0
        %262 = vmatpush1.msra.mxu0 %v241
        %263 = vmatprep.subr.mxu0 0.0
        %264 = vmatpush1.msra.mxu0 %v242
        %265 = vmatprep.subr.mxu0 0.0
        %266 = vmatpush1.msra.mxu0 %v243
        %267 = vmatprep.subr.mxu0 0.0
        %268 = vmatpush1.msra.mxu0 %v244
        %269 = vmatprep.subr.mxu0 0.0
        %270 = vmatpush1.msra.mxu0 %v245
        %271 = vmatprep.subr.mxu0 0.0
        %272 = vmatpush1.msra.mxu0 %v246
        %273 = vmatprep.subr.mxu0 0.0
        %274 = vmatpush1.msra.mxu0 %v247
        %275 = vmatprep.subr.mxu0 0.0
        %276 = vmatpush1.msra.mxu0 %v248
        %277 = vmatprep.subr.mxu0 0.0
        %278 = vmatpush1.msra.mxu0 %v249
        %279 = vmatprep.subr.mxu0 0.0
        %280 = vmatpush1.msra.mxu0 %v250
        %281 = vmatprep.subr.mxu0 0.0
        %282 = vmatpush1.msra.mxu0 %v251
        %283 = vmatprep.subr.mxu0 0.0
        %284 = vmatpush1.msra.mxu0 %v252
        %285 = vmatprep.subr.mxu0 0.0
        %286 = vmatpush1.msra.mxu0 0.0
        %287 = vmatprep.subr.mxu0 0.0
        %288 = vmatpush1.msra.mxu0 0.0
        %289 = vmatprep.subr.mxu0 0.0
        %290 = vmatpush1.msra.mxu0 0.0
        %291 = vmatprep.subr.mxu0 0.0
        %292 = vmatpush1.msra.mxu0 0.0
        %293 = vmatprep.subr.mxu0 0.0
        %294 = vmatpush1.msra.mxu0 0.0
        %295 = vmatprep.subr.mxu0 0.0
        %296 = vmatpush1.msra.mxu0 0.0
        %297 = vmatprep.subr.mxu0 0.0
        %298 = vmatpush1.msra.mxu0 0.0
        %299 = vmatprep.subr.mxu0 0.0
        %300 = vmatpush1.msra.mxu0 0.0
        %301 = vmatprep.subr.mxu0 0.0
        %302 = vmatpush1.msra.mxu0 0.0
        %303 = vmatprep.subr.mxu0 0.0
        %304 = vmatpush1.msra.mxu0 0.0
        %305 = vmatprep.subr.mxu0 0.0
        %306 = vmatpush1.msra.mxu0 0.0
        %307 = vmatprep.subr.mxu0 0.0
        %308 = vmatpush1.msra.mxu0 0.0
        %309 = vmatprep.subr.mxu0 0.0
        %310 = vmatpush1.msra.mxu0 0.0
        %311 = vmatprep.subr.mxu0 0.0
        %312 = vmatpush1.msra.mxu0 0.0
        %313 = vmatprep.subr.mxu0 0.0
        %314 = vmatpush1.msra.mxu0 0.0
        %315 = vmatprep.subr.mxu0 0.0
        %316 = vmatpush1.msra.mxu0 0.0
        %317 = vmatprep.mubr.f32.mxu0 0.0
        %318 = vmatmul.mubr.f32.gmra.mrb[0].mxu0 %v205
        %v319 = vpop.f32.mrb[0].mxu0
        %v320 = vadd.f32 0.0, %v319
        %v321 = vpop.f32.mrb[0].mxu0
        %322 = vmatprep.mubr.f32.mxu0 0.0
        %323 = vmatmul.mubr.f32.gmra.mrb[0].mxu0 %v206
        %v324 = vpop.f32.mrb[0].mxu0
        %v325 = vadd.f32 0.0, %v324
        %v326 = vpop.f32.mrb[0].mxu0
        %327 = vmatprep.mubr.f32.mxu0 0.0
        %328 = vmatmul.mubr.f32.gmra.mrb[0].mxu0 %v207
        %v329 = vpop.f32.mrb[0].mxu0
        %v330 = vadd.f32 0.0, %v329
        %v331 = vpop.f32.mrb[0].mxu0
        %332 = vmatprep.mubr.f32.mxu0 0.0
        %333 = vmatmul.mubr.f32.gmra.mrb[0].mxu0 %v208
        %v334 = vpop.f32.mrb[0].mxu0
        %v335 = vadd.f32 0.0, %v334
        %v336 = vpop.f32.mrb[0].mxu0
        %337 = vmatprep.mubr.f32.mxu0 0.0
        %338 = vmatmul.mubr.f32.gmra.mrb[0].mxu0 %v209
        %v339 = vpop.f32.mrb[0].mxu0
        %v340 = vadd.f32 0.0, %v339
        %v341 = vpop.f32.mrb[0].mxu0
        %342 = vmatprep.mubr.f32.mxu0 0.0
        %343 = vmatmul.mubr.f32.gmra.mrb[0].mxu0 %v210
        %v344 = vpop.f32.mrb[0].mxu0
        %v345 = vadd.f32 0.0, %v344
        %v346 = vpop.f32.mrb[0].mxu0
        %347 = vmatprep.mubr.f32.mxu0 0.0
        %348 = vmatmul.mubr.f32.gmra.mrb[0].mxu0 %v211
        %v349 = vpop.f32.mrb[0].mxu0
        %v350 = vadd.f32 0.0, %v349
        %v351 = vpop.f32.mrb[0].mxu0
        %352 = vmatprep.mubr.f32.mxu0 0.0
        %353 = vmatmul.mubr.f32.gmra.mrb[0].mxu0 %v212
        %v354 = vpop.f32.mrb[0].mxu0
        %v355 = vadd.f32 0.0, %v354
        %v356 = vpop.f32.mrb[0].mxu0
        %357 = vmatprep.mubr.f32.mxu0 0.0
        %358 = vmatmul.mubr.f32.gmra.mrb[0].mxu0 %v213
        %v359 = vpop.f32.mrb[0].mxu0
        %v360 = vadd.f32 0.0, %v359
        %v361 = vpop.f32.mrb[0].mxu0
        %362 = vmatprep.mubr.f32.mxu0 0.0
        %363 = vmatmul.mubr.f32.gmra.mrb[0].mxu0 %v214
        %v364 = vpop.f32.mrb[0].mxu0
        %v365 = vadd.f32 0.0, %v364
        %v366 = vpop.f32.mrb[0].mxu0
        %367 = vmatprep.mubr.f32.mxu0 0.0
        %368 = vmatmul.mubr.f32.gmra.mrb[0].mxu0 %v215
        %v369 = vpop.f32.mrb[0].mxu0
        %v370 = vadd.f32 0.0, %v369
        %v371 = vpop.f32.mrb[0].mxu0
        %372 = vmatprep.mubr.f32.mxu0 0.0
        %373 = vmatmul.mubr.f32.gmra.mrb[0].mxu0 %v216
        %v374 = vpop.f32.mrb[0].mxu0
        %v375 = vadd.f32 0.0, %v374
        %v376 = vpop.f32.mrb[0].mxu0
        %377 = vmatprep.mubr.f32.mxu0 0.0
        %378 = vmatmul.mubr.f32.gmra.mrb[0].mxu0 %v217
        %v379 = vpop.f32.mrb[0].mxu0
        %v380 = vadd.f32 0.0, %v379
        %v381 = vpop.f32.mrb[0].mxu0
        %382 = vmatprep.mubr.f32.mxu0 0.0
        %383 = vmatmul.mubr.f32.gmra.mrb[0].mxu0 %v218
        %v384 = vpop.f32.mrb[0].mxu0
        %v385 = vadd.f32 0.0, %v384
        %v386 = vpop.f32.mrb[0].mxu0
        %387 = vmatprep.mubr.f32.mxu0 0.0
        %388 = vmatmul.mubr.f32.gmra.mrb[0].mxu0 %v219
        %v389 = vpop.f32.mrb[0].mxu0
        %v390 = vadd.f32 0.0, %v389
        %v391 = vpop.f32.mrb[0].mxu0
        %392 = vmatprep.mubr.f32.mxu0 0.0
        %393 = vmatmul.mubr.f32.gmra.mrb[0].mxu0 %v220
        %v394 = vpop.f32.mrb[0].mxu0
        %v395 = vadd.f32 0.0, %v394
        %v396 = vpop.f32.mrb[0].mxu0
        %397 = vmatprep.mubr.f32.mxu0 0.0
        %398 = vmatmul.mubr.f32.gmra.mrb[0].mxu0 %v221
        %v399 = vpop.f32.mrb[0].mxu0
        %v400 = vadd.f32 0.0, %v399
        %v401 = vpop.f32.mrb[0].mxu0
        %402 = vmatprep.mubr.f32.mxu0 0.0
        %403 = vmatmul.mubr.f32.gmra.mrb[0].mxu0 %v222
        %v404 = vpop.f32.mrb[0].mxu0
        %v405 = vadd.f32 0.0, %v404
        %v406 = vpop.f32.mrb[0].mxu0
        %407 = vmatprep.mubr.f32.mxu0 0.0
        %408 = vmatmul.mubr.f32.gmra.mrb[0].mxu0 %v223
        %v409 = vpop.f32.mrb[0].mxu0
        %v410 = vadd.f32 0.0, %v409
        %v411 = vpop.f32.mrb[0].mxu0
        %412 = vmatprep.mubr.f32.mxu0 0.0
        %413 = vmatmul.mubr.f32.gmra.mrb[0].mxu0 %v224
        %v414 = vpop.f32.mrb[0].mxu0
        %v415 = vadd.f32 0.0, %v414
        %v416 = vpop.f32.mrb[0].mxu0
        %417 = vmatprep.mubr.f32.mxu0 0.0
        %418 = vmatmul.mubr.f32.gmra.mrb[0].mxu0 %v225
        %v419 = vpop.f32.mrb[0].mxu0
        %v420 = vadd.f32 0.0, %v419
        %v421 = vpop.f32.mrb[0].mxu0
        %422 = vmatprep.mubr.f32.mxu0 0.0
        %423 = vmatmul.mubr.f32.gmra.mrb[0].mxu0 %v226
        %v424 = vpop.f32.mrb[0].mxu0
        %v425 = vadd.f32 0.0, %v424
        %v426 = vpop.f32.mrb[0].mxu0
        %427 = vmatprep.mubr.f32.mxu0 0.0
        %428 = vmatmul.mubr.f32.gmra.mrb[0].mxu0 %v227
        %v429 = vpop.f32.mrb[0].mxu0
        %v430 = vadd.f32 0.0, %v429
        %v431 = vpop.f32.mrb[0].mxu0
        %432 = vmatprep.mubr.f32.mxu0 0.0
        %433 = vmatmul.mubr.f32.gmra.mrb[0].mxu0 %v228
        %v434 = vpop.f32.mrb[0].mxu0
        %v435 = vadd.f32 0.0, %v434
        %v436 = vpop.f32.mrb[0].mxu0
        %437 = vmatprep.mubr.f32.mxu0 0.0
        %438 = vmatmul.mubr.f32.gmra.mrb[0].mxu0 %v229
        %v439 = vpop.f32.mrb[0].mxu0
        %v440 = vadd.f32 0.0, %v439
        %v441 = vpop.f32.mrb[0].mxu0
        %442 = vmatprep.mubr.f32.mxu0 0.0
        %443 = vmatmul.mubr.f32.gmra.mrb[0].mxu0 %v230
        %v444 = vpop.f32.mrb[0].mxu0
        %v445 = vadd.f32 0.0, %v444
        %v446 = vpop.f32.mrb[0].mxu0
        %447 = vmatprep.mubr.f32.mxu0 0.0
        %448 = vmatmul.mubr.f32.gmra.mrb[0].mxu0 %v231
        %v449 = vpop.f32.mrb[0].mxu0
        %v450 = vadd.f32 0.0, %v449
        %v451 = vpop.f32.mrb[0].mxu0
        %452 = vmatprep.mubr.f32.mxu0 0.0
        %453 = vmatmul.mubr.f32.gmra.mrb[0].mxu0 %v232
        %v454 = vpop.f32.mrb[0].mxu0
        %v455 = vadd.f32 0.0, %v454
        %v456 = vpop.f32.mrb[0].mxu0
        %457 = vmatprep.mubr.f32.mxu0 0.0
        %458 = vmatmul.mubr.f32.gmra.mrb[0].mxu0 %v233
        %v459 = vpop.f32.mrb[0].mxu0
        %v460 = vadd.f32 0.0, %v459
        %v461 = vpop.f32.mrb[0].mxu0
        %462 = vmatprep.mubr.f32.mxu0 0.0
        %463 = vmatmul.mubr.f32.gmra.mrb[0].mxu0 %v234
        %v464 = vpop.f32.mrb[0].mxu0
        %v465 = vadd.f32 0.0, %v464
        %v466 = vpop.f32.mrb[0].mxu0
        %467 = vmatprep.mubr.f32.mxu0 0.0
        %468 = vmatmul.mubr.f32.gmra.mrb[0].mxu0 %v235
        %v469 = vpop.f32.mrb[0].mxu0
        %v470 = vadd.f32 0.0, %v469
        %v471 = vpop.f32.mrb[0].mxu0
        %472 = vmatprep.mubr.f32.mxu0 0.0
        %473 = vmatmul.mubr.f32.gmra.mrb[0].mxu0 %v236
        %v474 = vpop.f32.mrb[0].mxu0
        %v475 = vadd.f32 0.0, %v474
        %v476 = vpop.f32.mrb[0].mxu0
        %477 = vdwg.mxu0
        %478 = vst [vmem:[%s200] sm:$0xff] %v320
        %479 = vst [vmem:[%s200 + $0x8] sm:$0xff] %v325
        %480 = vst [vmem:[%s200 + $0x10] sm:$0xff] %v330
        %481 = vst [vmem:[%s200 + $0x18] sm:$0xff] %v335
        %482 = vst [vmem:[%s200 + $0x20] sm:$0xff] %v340
        %483 = vst [vmem:[%s200 + $0x28] sm:$0xff] %v345
        %484 = vst [vmem:[%s200 + $0x30] sm:$0xff] %v350
        %485 = vst [vmem:[%s200 + $0x38] sm:$0xff] %v355
        %486 = vst [vmem:[%s200 + $0x40] sm:$0xff] %v360
        %487 = vst [vmem:[%s200 + $0x48] sm:$0xff] %v365
        %488 = vst [vmem:[%s200 + $0x50] sm:$0xff] %v370
        %489 = vst [vmem:[%s200 + $0x58] sm:$0xff] %v375
        %490 = vst [vmem:[%s200 + $0x60] sm:$0xff] %v380
        %491 = vst [vmem:[%s200 + $0x68] sm:$0xff] %v385
        %492 = vst [vmem:[%s200 + $0x70] sm:$0xff] %v390
        %493 = vst [vmem:[%s200 + $0x78] sm:$0xff] %v395
        %494 = vst [vmem:[%s200 + $0x80] sm:$0xff] %v400
        %495 = vst [vmem:[%s200 + $0x88] sm:$0xff] %v405
        %496 = vst [vmem:[%s200 + $0x90] sm:$0xff] %v410
        %497 = vst [vmem:[%s200 + $0x98] sm:$0xff] %v415
        %498 = vst [vmem:[%s200 + $0xa0] sm:$0xff] %v420
        %499 = vst [vmem:[%s200 + $0xa8] sm:$0xff] %v425
        %500 = vst [vmem:[%s200 + $0xb0] sm:$0xff] %v430
        %501 = vst [vmem:[%s200 + $0xb8] sm:$0xff] %v435
        %502 = vst [vmem:[%s200 + $0xc0] sm:$0xff] %v440
        %503 = vst [vmem:[%s200 + $0xc8] sm:$0xff] %v445
        %504 = vst [vmem:[%s200 + $0xd0] sm:$0xff] %v450
        %505 = vst [vmem:[%s200 + $0xd8] sm:$0xff] %v455
        %506 = vst [vmem:[%s200 + $0xe0] sm:$0xff] %v460
        %507 = vst [vmem:[%s200 + $0xe8] sm:$0xff] %v465
        %508 = vst [vmem:[%s200 + $0xf0] sm:$0xff] %v470
        %509 = vst [vmem:[%s200 + $0xf8] sm:$0xff] %v475
        %p510 = scmp.eq.s32.totalorder %s23, 0
        // Predicated region
        $region37: #{tpu_custom_call.1} parent=27 // pred_check
          %p511 = pneg %p510
        $region38: #{tpu_custom_call.1} parent=27 // pred_check_branch
          %513 = sbr.rel (%p511) target = $region40
        $region39: #{tpu_custom_call.1} parent=27 // pred_region
          %514 = vst [vmem:[#allocation2] sm:$0x3] 0.0
        $region40: #{tpu_custom_call.1} parent=27 // pred_fallthru
          _
        %v515 = vadd.f32 %v320, %v325
        %v516 = vadd.f32 %v515, %v330
        %v517 = vadd.f32 %v516, %v335
        %v518 = vadd.f32 %v517, %v340
        %v519 = vadd.f32 %v518, %v345
        %v520 = vadd.f32 %v519, %v350
        %v521 = vadd.f32 %v520, %v355
        %v522 = vadd.f32 %v521, %v360
        %v523 = vadd.f32 %v522, %v365
        %v524 = vadd.f32 %v523, %v370
        %v525 = vadd.f32 %v524, %v375
        %v526 = vadd.f32 %v525, %v380
        %v527 = vadd.f32 %v526, %v385
        %v528 = vadd.f32 %v527, %v390
        %v529 = vadd.f32 %v528, %v395
        %v530 = vadd.f32 %v529, %v400
        %v531 = vadd.f32 %v530, %v405
        %v532 = vadd.f32 %v531, %v410
        %v533 = vadd.f32 %v532, %v415
        %v534 = vadd.f32 %v533, %v420
        %v535 = vadd.f32 %v534, %v425
        %v536 = vadd.f32 %v535, %v430
        %v537 = vadd.f32 %v536, %v435
        %v538 = vadd.f32 %v537, %v440
        %v539 = vadd.f32 %v538, %v445
        %v540 = vadd.f32 %v539, %v450
        %v541 = vadd.f32 %v540, %v455
        %v542 = vadd.f32 %v541, %v460
        %v543 = vadd.f32 %v542, %v465
        %v544 = vadd.f32 %v543, %v470
        %v545 = vadd.f32 %v544, %v475
        %v546 = vrot.slane %v545, 4
        %v547 = vadd.f32 %v545, %v546
        %v548 = vrot.slane %v547, 2
        %v549 = vadd.f32 %v547, %v548
        %v550 = vrot.slane %v549, 1
        %v551 = vadd.f32 %v549, %v550
        %v552 = vmul.f32 %v320, %v320
        %v553 = vmul.f32 %v325, %v325
        %v554 = vmul.f32 %v330, %v330
        %v555 = vmul.f32 %v335, %v335
        %v556 = vmul.f32 %v340, %v340
        %v557 = vmul.f32 %v345, %v345
        %v558 = vmul.f32 %v350, %v350
        %v559 = vmul.f32 %v355, %v355
        %v560 = vmul.f32 %v360, %v360
        %v561 = vmul.f32 %v365, %v365
        %v562 = vmul.f32 %v370, %v370
        %v563 = vmul.f32 %v375, %v375
        %v564 = vmul.f32 %v380, %v380
        %v565 = vmul.f32 %v385, %v385
        %v566 = vmul.f32 %v390, %v390
        %v567 = vmul.f32 %v395, %v395
        %v568 = vmul.f32 %v400, %v400
        %v569 = vmul.f32 %v405, %v405
        %v570 = vmul.f32 %v410, %v410
        %v571 = vmul.f32 %v415, %v415
        %v572 = vmul.f32 %v420, %v420
        %v573 = vmul.f32 %v425, %v425
        %v574 = vmul.f32 %v430, %v430
        %v575 = vmul.f32 %v435, %v435
        %v576 = vmul.f32 %v440, %v440
        %v577 = vmul.f32 %v445, %v445
        %v578 = vmul.f32 %v450, %v450
        %v579 = vmul.f32 %v455, %v455
        %v580 = vmul.f32 %v460, %v460
        %v581 = vmul.f32 %v465, %v465
        %v582 = vmul.f32 %v470, %v470
        %v583 = vmul.f32 %v475, %v475
        %v584 = vadd.f32 %v552, %v553
        %v585 = vadd.f32 %v584, %v554
        %v586 = vadd.f32 %v585, %v555
        %v587 = vadd.f32 %v586, %v556
        %v588 = vadd.f32 %v587, %v557
        %v589 = vadd.f32 %v588, %v558
        %v590 = vadd.f32 %v589, %v559
        %v591 = vadd.f32 %v590, %v560
        %v592 = vadd.f32 %v591, %v561
        %v593 = vadd.f32 %v592, %v562
        %v594 = vadd.f32 %v593, %v563
        %v595 = vadd.f32 %v594, %v564
        %v596 = vadd.f32 %v595, %v565
        %v597 = vadd.f32 %v596, %v566
        %v598 = vadd.f32 %v597, %v567
        %v599 = vadd.f32 %v598, %v568
        %v600 = vadd.f32 %v599, %v569
        %v601 = vadd.f32 %v600, %v570
        %v602 = vadd.f32 %v601, %v571
        %v603 = vadd.f32 %v602, %v572
        %v604 = vadd.f32 %v603, %v573
        %v605 = vadd.f32 %v604, %v574
        %v606 = vadd.f32 %v605, %v575
        %v607 = vadd.f32 %v606, %v576
        %v608 = vadd.f32 %v607, %v577
        %v609 = vadd.f32 %v608, %v578
        %v610 = vadd.f32 %v609, %v579
        %v611 = vadd.f32 %v610, %v580
        %v612 = vadd.f32 %v611, %v581
        %v613 = vadd.f32 %v612, %v582
        %v614 = vadd.f32 %v613, %v583
        %v615 = vrot.slane %v614, 4
        %v616 = vadd.f32 %v614, %v615
        %v617 = vrot.slane %v616, 2
        %v618 = vadd.f32 %v616, %v617
        %v619 = vrot.slane %v618, 1
        %v620 = vadd.f32 %v618, %v619
        %v621 = vld [vmem:[#allocation2] sm:$0x3]
        %vm622 = vcmask 1040384
        %v623 = vsel %vm622, %v551, %v620
        %v624 = vadd.f32 %v621, %v623
        %625 = vst [vmem:[#allocation2] sm:$0x3] %v624
        %p626 = scmp.eq.s32.totalorder %s23, 1
        // Predicated region
        $region41: #{tpu_custom_call.1} parent=27 // pred_check
          %p627 = pneg %p626
        $region42: #{tpu_custom_call.1} parent=27 // pred_check_branch
          %629 = sbr.rel (%p627) target = $region44
        $region43: #{tpu_custom_call.1} parent=27 // pred_region
          %v630 = vld [vmem:[#allocation2] sm:$0x1]
          %v631 = vmul.f32 %v630, 0.001953125
          %v632 = vld [vmem:[#allocation2 + $0x1] sm:$0x1]
          %v633 = vmul.f32 %v632, 0.001953125
          %v634 = vmul.f32 %v631, %v631
          %v635 = vsub.f32 %v633, %v634
          %v636 = vadd.f32 %v635, 1e-05
          %v637 = vrsqrt.pop %v636
          %v639 = vrot.slane %v637, 7
          %v641 = vsel %vm622, %v631, %v639
          %642 = vst [vmem:[#allocation9] sm:$0x3] %v641
        $region44: #{tpu_custom_call.1} parent=27 // pred_fallthru
          _
        %s643 = sand.u32 %s78, 1
        %s644 = scalar_lea.sflag [#allocation5], %s643
        %s645 = sand.u32 %s78, 1
        %s646 = smul.addr %s645, 256
        %s647 = scalar_lea.vmem [#allocation8], %s646
        // Predicated region
        $region45: #{tpu_custom_call.1} parent=27 // pred_check
          %p648 = pneg %p88
        $region46: #{tpu_custom_call.1} parent=27 // pred_check_branch
          %650 = sbr.rel (%p648) target = $region48
        $region47: #{tpu_custom_call.1} parent=27 // pred_region
          %s651 = smul.u32 32, %s23
          %s653 = ssub.s32 4096, 4096
          %654 = vsyncadd %s644, %s653
          %s655 = smul.addr %s651, 128
          %s656 = scalar_lea.hbm %s2, %s655
          %s657 = sshll.u32 %s647, 4
          %s658 = int_to_ptr.vmem [resolvable:$true] %s657
          %663 = dma.vmem_to_hbm [thread:$0]  %s658, 4096, %s656, %s644, 128, 128, 8
        $region48: #{tpu_custom_call.1} parent=27 // pred_fallthru
          _
        // Predicated region
        $region49: #{tpu_custom_call.1} parent=27 // pred_check
          %p664 = pneg %p109
        $region50: #{tpu_custom_call.1} parent=27 // pred_check_branch
          %666 = sbr.rel (%p664) target = $region52
        $region51: #{tpu_custom_call.1} parent=27 // pred_region
          %s668 = ssub.s32 32, 32
          %669 = vsyncadd [#allocation10], %s668
          %s671 = sshll.u32 [#allocation9], 4
          %s672 = int_to_ptr.vmem [resolvable:$true] %s671
          %674 = dma.vmem_to_hbm [thread:$0]  %s672, 32, %s3, [#allocation10]
        $region52: #{tpu_custom_call.1} parent=27 // pred_fallthru
          _
        // Predicated region
        $region53: #{tpu_custom_call.1} parent=27 // pred_check
          %p675 = pneg %p109
        $region54: #{tpu_custom_call.1} parent=27 // pred_check_branch
          %677 = sbr.rel (%p675) target = $region56
        $region55: #{tpu_custom_call.1} parent=27 // pred_region
          %678 = dma.done [#allocation10], 32
        $region56: #{tpu_custom_call.1} parent=27 // pred_fallthru
          _
      $region28: #{tpu_custom_call.1} parent=5 // pred_fallthru
        _
      %p679 = scmp.le.s32.totalorder 2, %s18
      // Predicated region
      $region57: #{tpu_custom_call.1} parent=5 // pred_check
        %p680 = pneg %p679
      $region58: #{tpu_custom_call.1} parent=5 // pred_check_branch
        %682 = sbr.rel (%p680) target = $region60
      $region59: #{tpu_custom_call.1} parent=5 // pred_region
        %s683 = ssub.s32 %s18, 2
        // Predicated region
        $region61: #{tpu_custom_call.1} parent=59 // pred_check
          %p684 = pneg %p94
        $region62: #{tpu_custom_call.1} parent=59 // pred_check_branch
          %686 = sbr.rel (%p684) target = $region64
        $region63: #{tpu_custom_call.1} parent=59 // pred_region
          %s687 = sand.u32 %s79, 1
          %s688 = scalar_lea.sflag [#allocation5], %s687
          %s689 = sand.u32 %s79, 1
          %s690 = smul.addr %s689, 256
          %s691 = scalar_lea.vmem [#allocation8], %s690
          %692 = dma.done %s688, 4096
        $region64: #{tpu_custom_call.1} parent=59 // pred_fallthru
          _
      $region60: #{tpu_custom_call.1} parent=5 // pred_fallthru
        _
    $region6: #{tpu_custom_call.1} parent=1 // loop_footer
      %s22 = sadd.s32 1, %s18
    $region7: #{tpu_custom_call.1} parent=1 // loop_footer_branch
      %17 = sbr.rel target = $region3
    $region8: #{tpu_custom_call.1} parent=1 // loop_exit
      _
    %693 = vsyncpa [#allocation4], 1
    %s694 = scalar_lea.sflag [#allocation4], 1
    %695 = vsyncpa %s694, 1
    %696 = vsyncpa [#allocation7], 1
    %697 = vsyncpa [#allocation5], 1
    %s698 = scalar_lea.sflag [#allocation5], 1
    %699 = vsyncpa %s698, 1
    %700 = vsyncpa [#allocation10], 1

</llo_original>
